<compile_context>
chip_gen: v7x
topology: tpu7x:2x2x1
jax: 0.10.0
libtpu: 0.0.40
codegen_flags: <defaults>
</compile_context>

<pallas_src>
import jax
import jax.numpy as jnp
from jax import lax
from jax.experimental import pallas as pl
from jax.experimental.pallas import tpu as pltpu


# ----------------------------------------------------------------------------
# Pallas kernel: full SpatialWiseSeparableConv forward for the whole batch.
#   x_ref  : [Cin+1, NHW]  channel-major input, last row == 1 (bias carrier)
#   w1_ref : [hidden, Cin+1] grouped-1x1 weight, shuffled, BN1 scale+bias folded
#   wk_ref : [16, NHW] packed per-lane constants:
#              rows 0..8  : 3x3 heightwise tap weights * width-edge mask * BN_h scale
#              row  9     : BN_h bias
#              rows 10..  : BN2 bias per output channel (broadcast over lanes)
#   w2_ref : [Cout, hidden] LinearConv weight with BN2 scale folded
#   o_ref  : [Cout, NHW]
# ----------------------------------------------------------------------------
def swsc_kernel(x_ref, w1_ref, wk_ref, w2_ref, o_ref):
    x = x_ref[...]                                             # [Cin+1, NHW]

    # --- PointWiseGroupConv (1x1, groups=3) + BN + ReLU6, channel-shuffled ---
    # group block-structure, shuffle permutation, BN scale (row scale) and BN
    # bias (bias column x ones-row of x) are all folded into w1.
    y = jnp.dot(w1_ref[...], x, preferred_element_type=jnp.float32)
    y = jnp.clip(y, 0.0, 6.0)                                  # [hidden, NHW]

    hidden, nhw = y.shape
    groups = 3
    csub = hidden // groups
    cout = o_ref.shape[0]

    # 0/1 channel-shift matrices (with split-boundary zeroing) rebuilt in-kernel
    # from iota -- no operand, one tiny MXU pass each when used.
    row = lax.broadcasted_iota(jnp.int32, (hidden, hidden), 0)  # output channel c
    col = lax.broadcasted_iota(jnp.int32, (hidden, hidden), 1)  # source channel c'

    def shift_matrix(delta):
        ok = col == row + delta
        for g in range(1, groups + 1):
            # rows whose source channel would cross a split boundary (or fall
            # off either end) are zeroed -> per-split zero padding.
            bad_row = (g - 1) * csub if delta < 0 else g * csub - 1
            ok = ok & (row != bad_row)
        return jnp.where(ok, 1.0, 0.0)

    # --- heightwise depthwise 3x3 conv, all 3 splits processed jointly ---
    # out[c,p] = sum_{dc,dw} K[h(p),dc,dw] * y[c+dc-1, p+dw-1]   (per-split pad)
    #   dc-shift + split-boundary zeros -> 0/1 shift-matrix matmul (MXU)
    #   dw-shift                        -> lane roll (XLU) + width-edge mask
    #   K[h(p),dc,dw]*mask*BN_h-scale   -> packed per-lane rows wk_ref[0..8]
    # Only one dc-shifted copy of y is live at a time (low vreg pressure).
    acc = None
    for dc in range(3):                       # source channel = c + dc - 1
        if dc == 1:
            base = y
        else:
            base = jnp.dot(shift_matrix(dc - 1), y,
                           preferred_element_type=jnp.float32)
        for dw in range(3):                   # source width = w + dw - 1
            shift = (1 - dw) % nhw
            v = base if shift == 0 else pltpu.roll(base, shift, axis=1)
            term = wk_ref[dc * 3 + dw:dc * 3 + dw + 1, :] * v
            acc = term if acc is None else acc + term

    # per-H BN (scale already folded into taps; bias = packed row 9) + ReLU6
    hw_out = jnp.clip(acc + wk_ref[9:10, :], 0.0, 6.0)
    concat = hw_out + y                       # cat(splits) + shuffled expansion

    # --- LinearConv (1x1) + BN (scale folded into w2, bias = packed rows 10..) ---
    z = jnp.dot(w2_ref[...], concat, preferred_element_type=jnp.float32)
    o_ref[...] = z + wk_ref[10:10 + cout, :]


# ----------------------------------------------------------------------------
# Wrapper: single grid-less pallas_call on channel-major flat layout.
# ----------------------------------------------------------------------------
def swsc_pallas(x_aug, w1_aug, wkpack, w2s):
    cout = w2s.shape[0]
    nhw = x_aug.shape[1]
    return pl.pallas_call(
        swsc_kernel,
        out_shape=jax.ShapeDtypeStruct((cout, nhw), jnp.float32),
    )(x_aug, w1_aug, wkpack, w2s)


def prepare_input(x_nchw):
    """Producer-side relayout: NCHW -> channel-major [Cin, N*H*W] plus a ones
    row (carrier for the folded pointwise-conv BN bias). Done once, outside the
    kernel wrapper."""
    N, C, H, W = x_nchw.shape
    xf = x_nchw.astype(jnp.float32).transpose(1, 0, 2, 3).reshape(C, N * H * W)
    ones = jnp.ones((1, N * H * W), jnp.float32)
    return jnp.concatenate([xf, ones], axis=0)


# ----------------------------------------------------------------------------
# Parameter construction (deterministic, synthetic) + eval-mode BN folding
# and operand packing.
# ----------------------------------------------------------------------------
def bn_make(key, c):
    k1, k2, k3, k4 = jax.random.split(key, 4)
    gamma = 1.0 + 0.1 * jax.random.normal(k1, (c,), jnp.float32)
    beta = 0.1 * jax.random.normal(k2, (c,), jnp.float32)
    mean = 0.1 * jax.random.normal(k3, (c,), jnp.float32)
    var = jax.random.uniform(k4, (c,), jnp.float32, 0.5, 1.5)
    return gamma, beta, mean, var


def bn_fold(p, eps=1e-5):
    gamma, beta, mean, var = p
    scale = gamma / jnp.sqrt(var + eps)
    bias = beta - mean * scale
    return scale, bias


def build_params(key, cin, cout, hidden, N, H, W):
    groups = 3
    cin_g = cin // groups
    cout_g = hidden // groups
    HW = H * W
    NHW = N * HW

    k = jax.random.split(key, 6)
    w_pw = 0.1 * jax.random.normal(k[0], (hidden, cin_g, 1, 1), jnp.float32)
    bn1 = bn_make(k[1], hidden)
    w_kh = 0.1 * jax.random.normal(k[2], (H, 1, 3, 3), jnp.float32)
    bnh = bn_make(k[3], H)
    w_lin = 0.1 * jax.random.normal(k[4], (cout, hidden, 1, 1), jnp.float32)
    bn2 = bn_make(k[5], cout)

    # dense block-diagonal weight for the grouped 1x1 conv
    w1_dense = jnp.zeros((hidden, cin), jnp.float32)
    for o in range(hidden):
        g = o // cout_g
        w1_dense = w1_dense.at[o, g * cin_g:(g + 1) * cin_g].set(w_pw[o, :, 0, 0])

    # channel-shuffle permutation (groups=3): new channel m*3+g <- old g*cout_g+m
    perm = jnp.array([g * cout_g + m for m in range(cout_g) for g in range(groups)],
                     dtype=jnp.int32)
    s1, b1 = bn_fold(bn1)
    # fold BN1 scale into rows, shuffle, append BN1 bias column (x gets a ones row)
    w1_aug = jnp.concatenate(
        [(s1[:, None] * w1_dense)[perm], b1[perm][:, None]], axis=1)  # [hidden, cin+1]

    # packed per-lane constants (single dense 2D operand):
    #   rows 0..8  : K[h,dc,dw] * width-edge mask * BN_h scale, tiled over batch
    #   row  9     : BN_h bias
    #   rows 10..  : BN2 bias (per output channel, broadcast over lanes)
    K = w_kh[:, 0]                                       # [H, 3, 3]
    p = jnp.arange(NHW)
    ww = p % W
    hh = (p % HW) // W
    sh_c, bh_c = bn_fold(bnh)
    sh = sh_c[hh]

    pack_rows = ((10 + cout + 7) // 8) * 8
    assert 10 + cout <= pack_rows
    wkpack = jnp.zeros((pack_rows, NHW), jnp.float32)
    for dc in range(3):
        for dw in range(3):
            mask = ((ww + dw - 1 >= 0) & (ww + dw - 1 < W)).astype(jnp.float32)
            wkpack = wkpack.at[dc * 3 + dw].set(K[hh, dc, dw] * mask * sh)
    wkpack = wkpack.at[9].set(bh_c[hh])

    s2, b2 = bn_fold(bn2)
    w2s = s2[:, None] * w_lin[:, :, 0, 0]                # [cout, hidden]
    for o in range(cout):
        wkpack = wkpack.at[10 + o].set(jnp.full((NHW,), b2[o], jnp.float32))

    raw = dict(w_pw=w_pw, bn1=bn1, w_kh=w_kh, bnh=bnh, w_lin=w_lin, bn2=bn2)
    packed = (w1_aug, wkpack, w2s)
    return packed, raw


# ----------------------------------------------------------------------------
# Pure-JAX reference (mirrors the PyTorch module with eval-mode BatchNorm).
# ----------------------------------------------------------------------------
def reference(x, raw, eps=1e-5):
    def bn(y, prm):
        gamma, beta, mean, var = prm
        shp = (1, -1, 1, 1)
        return ((y - mean.reshape(shp)) / jnp.sqrt(var.reshape(shp) + eps)
                * gamma.reshape(shp) + beta.reshape(shp))

    dn = ('NCHW', 'OIHW', 'NCHW')
    y = lax.conv_general_dilated(x, raw['w_pw'], (1, 1), 'VALID',
                                 dimension_numbers=dn, feature_group_count=3)
    y = jnp.clip(bn(y, raw['bn1']), 0.0, 6.0)
    N, C, H, W = y.shape
    y = y.reshape(N, 3, C // 3, H, W).transpose(0, 2, 1, 3, 4).reshape(N, C, H, W)
    csub = C // 3
    outs = []
    for s in range(3):
        t = y[:, s * csub:(s + 1) * csub].transpose(0, 2, 1, 3)   # [N, H, csub, W]
        u = lax.conv_general_dilated(t, raw['w_kh'], (1, 1), ((1, 1), (1, 1)),
                                     dimension_numbers=dn, feature_group_count=H)
        u = jnp.clip(bn(u, raw['bnh']), 0.0, 6.0)
        outs.append(u.transpose(0, 2, 1, 3))
    cat = jnp.concatenate(outs, axis=1) + y
    z = lax.conv_general_dilated(cat, raw['w_lin'], (1, 1), 'VALID',
                                 dimension_numbers=dn)
    return bn(z, raw['bn2'])                              # no residual in this module


# ----------------------------------------------------------------------------
if __name__ == "__main__":
    N, Cin, H, W = 2, 6, 16, 16
    Cout = 6
    hidden = 12                                           # expand_ratio 2, % 3 == 0

    # TODO(synk): BatchNorm is implemented in eval mode (folded running stats);
    # training-mode batch statistics are not reproduced.

    kx, kp = jax.random.split(jax.random.PRNGKey(0), 2)
    params, raw = build_params(kp, Cin, Cout, hidden, N, H, W)
    x = jax.random.normal(kx, (N, Cin, H, W), jnp.float32)

    # Producer-side relayout (done once, not part of the kernel wrapper).
    x_aug = prepare_input(x)

    out_flat = swsc_pallas(x_aug, *params)                # [Cout, N*H*W]
    out_flat = jax.block_until_ready(out_flat)

    # Consumer-side relayout, only for the NCHW correctness check.
    out = out_flat.reshape(Cout, N, H, W).transpose(1, 0, 2, 3)

    ref = reference(x, raw)
    err = float(jnp.max(jnp.abs(out - ref)))
    assert out.shape == (N, Cout, H, W)
    assert err < 5e-4, f"max abs error {err}"
    print("KERNEL_OK")
</pallas_src>

<mosaic_0001>
module attributes {stable_mosaic.version = 11 : i64} {
  func.func @swsc_kernel(%arg0: memref<7x512xf32, #tpu.memory_space<vmem>>, %arg1: memref<12x7xf32, #tpu.memory_space<vmem>>, %arg2: memref<16x512xf32, #tpu.memory_space<vmem>>, %arg3: memref<6x12xf32, #tpu.memory_space<vmem>>, %arg4: memref<6x512xf32, #tpu.memory_space<vmem>>) attributes {dimension_semantics = [], scalar_prefetch = 0 : i64, scratch_operands = 0 : i64, tpu.core_type = #tpu.core_type<tc>} {
    %c0 = arith.constant 0 : index
    %c0_0 = arith.constant 0 : index
    %0 = vector.load %arg0[%c0, %c0_0] : memref<7x512xf32, #tpu.memory_space<vmem>>, vector<7x512xf32>
    %c0_1 = arith.constant 0 : index
    %c0_2 = arith.constant 0 : index
    %1 = vector.load %arg1[%c0_1, %c0_2] : memref<12x7xf32, #tpu.memory_space<vmem>>, vector<12x7xf32>
    %cst = arith.constant dense<0.000000e+00> : vector<12x512xf32>
    %2 = tpu.matmul %1, %0, %cst {dimension_numbers = #tpu.dot_dimension_numbers<[1], [0], [0], [1], [0, 0, 1, 1], [], []>} : vector<12x7xf32>, vector<7x512xf32>, vector<12x512xf32> -> vector<12x512xf32>
    %cst_3 = arith.constant 0.000000e+00 : f32
    %cst_4 = arith.constant 6.000000e+00 : f32
    %3 = vector.broadcast %cst_3 : f32 to vector<12x512xf32>
    %4 = arith.maximumf %3, %2 : vector<12x512xf32>
    %5 = vector.broadcast %cst_4 : f32 to vector<12x512xf32>
    %6 = arith.minimumf %5, %4 : vector<12x512xf32>
    %7 = tpu.iota {dimensions = array<i32: 0>} : vector<12x12xi32>
    %8 = tpu.iota {dimensions = array<i32: 1>} : vector<12x12xi32>
    %c-1_i32 = arith.constant -1 : i32
    %9 = vector.broadcast %c-1_i32 : i32 to vector<12x12xi32>
    %10 = arith.addi %7, %9 : vector<12x12xi32>
    %11 = arith.cmpi eq, %8, %10 : vector<12x12xi32>
    %c0_i32 = arith.constant 0 : i32
    %12 = vector.broadcast %c0_i32 : i32 to vector<12x12xi32>
    %13 = arith.cmpi ne, %7, %12 : vector<12x12xi32>
    %14 = arith.andi %11, %13 : vector<12x12xi1>
    %c4_i32 = arith.constant 4 : i32
    %15 = vector.broadcast %c4_i32 : i32 to vector<12x12xi32>
    %16 = arith.cmpi ne, %7, %15 : vector<12x12xi32>
    %17 = arith.andi %14, %16 : vector<12x12xi1>
    %c8_i32 = arith.constant 8 : i32
    %18 = vector.broadcast %c8_i32 : i32 to vector<12x12xi32>
    %19 = arith.cmpi ne, %7, %18 : vector<12x12xi32>
    %20 = arith.andi %17, %19 : vector<12x12xi1>
    %cst_5 = arith.constant 1.000000e+00 : f32
    %cst_6 = arith.constant 0.000000e+00 : f32
    %21 = vector.broadcast %cst_5 : f32 to vector<12x12xf32>
    %22 = vector.broadcast %cst_6 : f32 to vector<12x12xf32>
    %23 = arith.select %20, %21, %22 : vector<12x12xi1>, vector<12x12xf32>
    %cst_7 = arith.constant dense<0.000000e+00> : vector<12x512xf32>
    %24 = tpu.matmul %23, %6, %cst_7 {dimension_numbers = #tpu.dot_dimension_numbers<[1], [0], [0], [1], [0, 0, 1, 1], [], []>} : vector<12x12xf32>, vector<12x512xf32>, vector<12x512xf32> -> vector<12x512xf32>
    %c1_i32 = arith.constant 1 : i32
    %25 = tpu.dynamic_rotate %24 by %c1_i32 dim 1 : vector<12x512xf32>, i32 -> vector<12x512xf32>
    %c0_8 = arith.constant 0 : index
    %c0_9 = arith.constant 0 : index
    %26 = vector.load %arg2[%c0_8, %c0_9] : memref<16x512xf32, #tpu.memory_space<vmem>>, vector<1x512xf32>
    %27 = vector.broadcast %26 : vector<1x512xf32> to vector<12x512xf32>
    %28 = arith.mulf %27, %25 : vector<12x512xf32>
    %c1 = arith.constant 1 : index
    %c0_10 = arith.constant 0 : index
    %29 = vector.load %arg2[%c1, %c0_10] : memref<16x512xf32, #tpu.memory_space<vmem>>, vector<1x512xf32>
    %30 = vector.broadcast %29 : vector<1x512xf32> to vector<12x512xf32>
    %31 = arith.mulf %30, %24 : vector<12x512xf32>
    %32 = arith.addf %28, %31 : vector<12x512xf32>
    %c511_i32 = arith.constant 511 : i32
    %33 = tpu.dynamic_rotate %24 by %c511_i32 dim 1 : vector<12x512xf32>, i32 -> vector<12x512xf32>
    %c2 = arith.constant 2 : index
    %c0_11 = arith.constant 0 : index
    %34 = vector.load %arg2[%c2, %c0_11] : memref<16x512xf32, #tpu.memory_space<vmem>>, vector<1x512xf32>
    %35 = vector.broadcast %34 : vector<1x512xf32> to vector<12x512xf32>
    %36 = arith.mulf %35, %33 : vector<12x512xf32>
    %37 = arith.addf %32, %36 : vector<12x512xf32>
    %c1_i32_12 = arith.constant 1 : i32
    %38 = tpu.dynamic_rotate %6 by %c1_i32_12 dim 1 : vector<12x512xf32>, i32 -> vector<12x512xf32>
    %c3 = arith.constant 3 : index
    %c0_13 = arith.constant 0 : index
    %39 = vector.load %arg2[%c3, %c0_13] : memref<16x512xf32, #tpu.memory_space<vmem>>, vector<1x512xf32>
    %40 = vector.broadcast %39 : vector<1x512xf32> to vector<12x512xf32>
    %41 = arith.mulf %40, %38 : vector<12x512xf32>
    %42 = arith.addf %37, %41 : vector<12x512xf32>
    %c4 = arith.constant 4 : index
    %c0_14 = arith.constant 0 : index
    %43 = vector.load %arg2[%c4, %c0_14] : memref<16x512xf32, #tpu.memory_space<vmem>>, vector<1x512xf32>
    %44 = vector.broadcast %43 : vector<1x512xf32> to vector<12x512xf32>
    %45 = arith.mulf %44, %6 : vector<12x512xf32>
    %46 = arith.addf %42, %45 : vector<12x512xf32>
    %c511_i32_15 = arith.constant 511 : i32
    %47 = tpu.dynamic_rotate %6 by %c511_i32_15 dim 1 : vector<12x512xf32>, i32 -> vector<12x512xf32>
    %c5 = arith.constant 5 : index
    %c0_16 = arith.constant 0 : index
    %48 = vector.load %arg2[%c5, %c0_16] : memref<16x512xf32, #tpu.memory_space<vmem>>, vector<1x512xf32>
    %49 = vector.broadcast %48 : vector<1x512xf32> to vector<12x512xf32>
    %50 = arith.mulf %49, %47 : vector<12x512xf32>
    %51 = arith.addf %46, %50 : vector<12x512xf32>
    %c1_i32_17 = arith.constant 1 : i32
    %52 = vector.broadcast %c1_i32_17 : i32 to vector<12x12xi32>
    %53 = arith.addi %7, %52 : vector<12x12xi32>
    %54 = arith.cmpi eq, %8, %53 : vector<12x12xi32>
    %c3_i32 = arith.constant 3 : i32
    %55 = vector.broadcast %c3_i32 : i32 to vector<12x12xi32>
    %56 = arith.cmpi ne, %7, %55 : vector<12x12xi32>
    %57 = arith.andi %54, %56 : vector<12x12xi1>
    %c7_i32 = arith.constant 7 : i32
    %58 = vector.broadcast %c7_i32 : i32 to vector<12x12xi32>
    %59 = arith.cmpi ne, %7, %58 : vector<12x12xi32>
    %60 = arith.andi %57, %59 : vector<12x12xi1>
    %c11_i32 = arith.constant 11 : i32
    %61 = vector.broadcast %c11_i32 : i32 to vector<12x12xi32>
    %62 = arith.cmpi ne, %7, %61 : vector<12x12xi32>
    %63 = arith.andi %60, %62 : vector<12x12xi1>
    %cst_18 = arith.constant 1.000000e+00 : f32
    %cst_19 = arith.constant 0.000000e+00 : f32
    %64 = vector.broadcast %cst_18 : f32 to vector<12x12xf32>
    %65 = vector.broadcast %cst_19 : f32 to vector<12x12xf32>
    %66 = arith.select %63, %64, %65 : vector<12x12xi1>, vector<12x12xf32>
    %cst_20 = arith.constant dense<0.000000e+00> : vector<12x512xf32>
    %67 = tpu.matmul %66, %6, %cst_20 {dimension_numbers = #tpu.dot_dimension_numbers<[1], [0], [0], [1], [0, 0, 1, 1], [], []>} : vector<12x12xf32>, vector<12x512xf32>, vector<12x512xf32> -> vector<12x512xf32>
    %c1_i32_21 = arith.constant 1 : i32
    %68 = tpu.dynamic_rotate %67 by %c1_i32_21 dim 1 : vector<12x512xf32>, i32 -> vector<12x512xf32>
    %c6 = arith.constant 6 : index
    %c0_22 = arith.constant 0 : index
    %69 = vector.load %arg2[%c6, %c0_22] : memref<16x512xf32, #tpu.memory_space<vmem>>, vector<1x512xf32>
    %70 = vector.broadcast %69 : vector<1x512xf32> to vector<12x512xf32>
    %71 = arith.mulf %70, %68 : vector<12x512xf32>
    %72 = arith.addf %51, %71 : vector<12x512xf32>
    %c7 = arith.constant 7 : index
    %c0_23 = arith.constant 0 : index
    %73 = vector.load %arg2[%c7, %c0_23] : memref<16x512xf32, #tpu.memory_space<vmem>>, vector<1x512xf32>
    %74 = vector.broadcast %73 : vector<1x512xf32> to vector<12x512xf32>
    %75 = arith.mulf %74, %67 : vector<12x512xf32>
    %76 = arith.addf %72, %75 : vector<12x512xf32>
    %c511_i32_24 = arith.constant 511 : i32
    %77 = tpu.dynamic_rotate %67 by %c511_i32_24 dim 1 : vector<12x512xf32>, i32 -> vector<12x512xf32>
    %c8 = arith.constant 8 : index
    %c0_25 = arith.constant 0 : index
    %78 = vector.load %arg2[%c8, %c0_25] : memref<16x512xf32, #tpu.memory_space<vmem>>, vector<1x512xf32>
    %79 = vector.broadcast %78 : vector<1x512xf32> to vector<12x512xf32>
    %80 = arith.mulf %79, %77 : vector<12x512xf32>
    %81 = arith.addf %76, %80 : vector<12x512xf32>
    %c9 = arith.constant 9 : index
    %c0_26 = arith.constant 0 : index
    %82 = vector.load %arg2[%c9, %c0_26] : memref<16x512xf32, #tpu.memory_space<vmem>>, vector<1x512xf32>
    %83 = vector.broadcast %82 : vector<1x512xf32> to vector<12x512xf32>
    %84 = arith.addf %81, %83 : vector<12x512xf32>
    %cst_27 = arith.constant 0.000000e+00 : f32
    %cst_28 = arith.constant 6.000000e+00 : f32
    %85 = vector.broadcast %cst_27 : f32 to vector<12x512xf32>
    %86 = arith.maximumf %85, %84 : vector<12x512xf32>
    %87 = vector.broadcast %cst_28 : f32 to vector<12x512xf32>
    %88 = arith.minimumf %87, %86 : vector<12x512xf32>
    %89 = arith.addf %88, %6 : vector<12x512xf32>
    %c0_29 = arith.constant 0 : index
    %c0_30 = arith.constant 0 : index
    %90 = vector.load %arg3[%c0_29, %c0_30] : memref<6x12xf32, #tpu.memory_space<vmem>>, vector<6x12xf32>
    %cst_31 = arith.constant dense<0.000000e+00> : vector<6x512xf32>
    %91 = tpu.matmul %90, %89, %cst_31 {dimension_numbers = #tpu.dot_dimension_numbers<[1], [0], [0], [1], [0, 0, 1, 1], [], []>} : vector<6x12xf32>, vector<12x512xf32>, vector<6x512xf32> -> vector<6x512xf32>
    %c10 = arith.constant 10 : index
    %c0_32 = arith.constant 0 : index
    %92 = vector.load %arg2[%c10, %c0_32] : memref<16x512xf32, #tpu.memory_space<vmem>>, vector<6x512xf32>
    %93 = arith.addf %91, %92 : vector<6x512xf32>
    %c0_33 = arith.constant 0 : index
    %c0_34 = arith.constant 0 : index
    %94 = vector.load %arg4[%c0_33, %c0_34] : memref<6x512xf32, #tpu.memory_space<vmem>>, vector<6x512xf32>
    tpu.vector_store %arg4[%c0_33, %c0_34], %93 {strides = array<i32>} : memref<6x512xf32, #tpu.memory_space<vmem>>, vector<6x512xf32>,
    return
  }
}

</mosaic_0001>

<llo_original>
// kernel: tpu_custom_call.1
$region0: #{tpu_custom_call.1}
  #allocation0 [shape = 'u32[]', space=smem, size = 0x4, offset = 0x4, fixed_abs, tag = 'smem constant byte address 0x4 - core index']
  #allocation1 [shape = 'u32[144,128]{1,0:T(1,128)}', space=vmem, size = 0x12000, scoped, tag = 'internal scratch']
  %s0 = inlined_call_operand.hbm [shape: f32[7,512], index: 0, kind: input, shape index: {}]
  %s1 = inlined_call_operand.vmem [shape: f32[12,7], index: 1, kind: input, shape index: {}]
  %s2 = inlined_call_operand.hbm [shape: f32[16,512], index: 2, kind: input, shape index: {}]
  %s3 = inlined_call_operand.vmem [shape: f32[6,12], index: 3, kind: input, shape index: {}]
  %s4 = inlined_call_operand.hbm [shape: f32[6,512], index: 4, kind: output, shape index: {}]
  %s5 = sld [smem:[#allocation0]]
  $region34: #{tpu_custom_call.1} parent=0
    _
  %s7 = ssub.s32 1, %s5
  %s8 = scalar_select 0, %s7, %s5
  $region1: #{tpu_custom_call.1} parent=0
    #allocation2 [shape = 'u8[16384]{0}', space=vmem, size = 0x4000, scoped, tag = 'input window, operand 0, single buffered']
    #allocation3 [shape = 's32[1]{0}', space=sflag, size = 0x4, scoped, tag = 'scoped memory for tpu_custom_call.1']
    #allocation4 [shape = 's32[1]{0}', space=sflag, size = 0x4, scoped, tag = 'scoped memory for tpu_custom_call.1']
    #allocation5 [shape = 'u8[32768]{0}', space=vmem, size = 0x8000, scoped, tag = 'input window, operand 2, single buffered']
    #allocation6 [shape = 's32[1]{0}', space=sflag, size = 0x4, scoped, tag = 'scoped memory for tpu_custom_call.1']
    #allocation7 [shape = 'u8[16384]{0}', space=vmem, size = 0x4000, scoped, tag = 'output window, operand 0, single buffered']
    %9 = vsyncpa [#allocation3], 0
    %10 = vsyncpa [#allocation6], 0
    %11 = vsyncpa [#allocation4], 0
    // Predicated region
    $region2: #{tpu_custom_call.1} parent=1 // pred_check
      _
    $region3: #{tpu_custom_call.1} parent=1 // pred_check_branch
      %13 = sbr.rel (0) target = $region5
    $region4: #{tpu_custom_call.1} parent=1 // pred_region
      %s15 = ssub.s32 512, 512
      %16 = vsyncadd [#allocation3], %s15
      %s18 = sshll.u32 [#allocation2], 4
      %s19 = int_to_ptr.vmem [resolvable:$true] %s18
      %21 = dma.hbm_to_vmem [thread:$0]  %s0, 512, %s19, [#allocation3]
    $region5: #{tpu_custom_call.1} parent=1 // pred_fallthru
      _
    // Predicated region
    $region6: #{tpu_custom_call.1} parent=1 // pred_check
      _
    $region7: #{tpu_custom_call.1} parent=1 // pred_check_branch
      %23 = sbr.rel (0) target = $region9
    $region8: #{tpu_custom_call.1} parent=1 // pred_region
      _
    $region9: #{tpu_custom_call.1} parent=1 // pred_fallthru
      _
    // Predicated region
    $region10: #{tpu_custom_call.1} parent=1 // pred_check
      _
    $region11: #{tpu_custom_call.1} parent=1 // pred_check_branch
      %25 = sbr.rel (0) target = $region13
    $region12: #{tpu_custom_call.1} parent=1 // pred_region
      %s27 = ssub.s32 1024, 1024
      %28 = vsyncadd [#allocation6], %s27
      %s29 = sshll.u32 [#allocation5], 4
      %s30 = int_to_ptr.vmem [resolvable:$true] %s29
      %35 = dma.hbm_to_vmem [thread:$0]  %s2, 1024, %s30, [#allocation6], 512, 512, 32
    $region13: #{tpu_custom_call.1} parent=1 // pred_fallthru
      _
    // Predicated region
    $region14: #{tpu_custom_call.1} parent=1 // pred_check
      _
    $region15: #{tpu_custom_call.1} parent=1 // pred_check_branch
      %37 = sbr.rel (0) target = $region17
    $region16: #{tpu_custom_call.1} parent=1 // pred_region
      _
    $region17: #{tpu_custom_call.1} parent=1 // pred_fallthru
      _
    // Predicated region
    $region18: #{tpu_custom_call.1} parent=1 // pred_check
      _
    $region19: #{tpu_custom_call.1} parent=1 // pred_check_branch
      %39 = sbr.rel (0) target = $region21
    $region20: #{tpu_custom_call.1} parent=1 // pred_region
      %40 = dma.done [#allocation3], 512
    $region21: #{tpu_custom_call.1} parent=1 // pred_fallthru
      _
    // Predicated region
    $region22: #{tpu_custom_call.1} parent=1 // pred_check
      _
    $region23: #{tpu_custom_call.1} parent=1 // pred_check_branch
      %42 = sbr.rel (0) target = $region25
    $region24: #{tpu_custom_call.1} parent=1 // pred_region
      %43 = dma.done [#allocation6], 1024
    $region25: #{tpu_custom_call.1} parent=1 // pred_fallthru
      _
    %v44 = vld [vmem:[#allocation2] sm:$0x7f]
    %v45 = vld [vmem:[#allocation2 + $0x8] sm:$0x7f]
    %v46 = vld [vmem:[#allocation2 + $0x10] sm:$0x7f]
    %v47 = vld [vmem:[#allocation2 + $0x18] sm:$0x7f]
    %v48 = vld [vmem:[%s1] sm:$0xff]
    %v49 = vld [vmem:[%s1 + $0x8] sm:$0xf]
    %vm50 = vcmask 56320
    %v52 = vsel %vm50, %v48, 0
    %v55 = vsel %vm50, %v49, 0
    %vm57 = vcmask 1046528
    %v59 = vsel %vm57, %v44, 0
    %v62 = vsel %vm57, %v45, 0
    %v65 = vsel %vm57, %v46, 0
    %v68 = vsel %vm57, %v47, 0
    %70 = vmatprep.subr.mxu0 %v62
    %71 = vmatpush1.msra.mxu0 %v59
    %72 = vmatprep.subr.mxu0 0.0
    %73 = vmatpush1.msra.mxu0 0.0
    %74 = vmatprep.subr.mxu0 0.0
    %75 = vmatpush1.msra.mxu0 0.0
    %76 = vmatprep.subr.mxu0 0.0
    %77 = vmatpush1.msra.mxu0 0.0
    %78 = vmatprep.subr.mxu0 0.0
    %79 = vmatpush1.msra.mxu0 0.0
    %80 = vmatprep.subr.mxu0 0.0
    %81 = vmatpush1.msra.mxu0 0.0
    %82 = vmatprep.subr.mxu0 0.0
    %83 = vmatpush1.msra.mxu0 0.0
    %84 = vmatprep.subr.mxu0 0.0
    %85 = vmatpush1.msra.mxu0 0.0
    %86 = vmatprep.subr.mxu0 0.0
    %87 = vmatpush1.msra.mxu0 0.0
    %88 = vmatprep.subr.mxu0 0.0
    %89 = vmatpush1.msra.mxu0 0.0
    %90 = vmatprep.subr.mxu0 0.0
    %91 = vmatpush1.msra.mxu0 0.0
    %92 = vmatprep.subr.mxu0 0.0
    %93 = vmatpush1.msra.mxu0 0.0
    %94 = vmatprep.subr.mxu0 0.0
    %95 = vmatpush1.msra.mxu0 0.0
    %96 = vmatprep.subr.mxu0 0.0
    %97 = vmatpush1.msra.mxu0 0.0
    %98 = vmatprep.subr.mxu0 0.0
    %99 = vmatpush1.msra.mxu0 0.0
    %100 = vmatprep.subr.mxu0 0.0
    %101 = vmatpush1.msra.mxu0 0.0
    %102 = vmatprep.subr.mxu0 0.0
    %103 = vmatpush1.msra.mxu0 0.0
    %104 = vmatprep.subr.mxu0 0.0
    %105 = vmatpush1.msra.mxu0 0.0
    %106 = vmatprep.subr.mxu0 0.0
    %107 = vmatpush1.msra.mxu0 0.0
    %108 = vmatprep.subr.mxu0 0.0
    %109 = vmatpush1.msra.mxu0 0.0
    %110 = vmatprep.subr.mxu0 0.0
    %111 = vmatpush1.msra.mxu0 0.0
    %112 = vmatprep.subr.mxu0 0.0
    %113 = vmatpush1.msra.mxu0 0.0
    %114 = vmatprep.subr.mxu0 0.0
    %115 = vmatpush1.msra.mxu0 0.0
    %116 = vmatprep.subr.mxu0 0.0
    %117 = vmatpush1.msra.mxu0 0.0
    %118 = vmatprep.subr.mxu0 0.0
    %119 = vmatpush1.msra.mxu0 0.0
    %120 = vmatprep.subr.mxu0 0.0
    %121 = vmatpush1.msra.mxu0 0.0
    %122 = vmatprep.subr.mxu0 0.0
    %123 = vmatpush1.msra.mxu0 0.0
    %124 = vmatprep.subr.mxu0 0.0
    %125 = vmatpush1.msra.mxu0 0.0
    %126 = vmatprep.subr.mxu0 0.0
    %127 = vmatpush1.msra.mxu0 0.0
    %128 = vmatprep.subr.mxu0 0.0
    %129 = vmatpush1.msra.mxu0 0.0
    %130 = vmatprep.subr.mxu0 0.0
    %131 = vmatpush1.msra.mxu0 0.0
    %132 = vmatprep.subr.mxu0 0.0
    %133 = vmatpush1.msra.mxu0 0.0
    %134 = vmatprep.mubr.f32.mxu0 0.0
    %135 = vmatmul.mubr.f32.gmra.mrb[0].mxu0 %v52
    %v136 = vpop.f32.mrb[0].mxu0
    %v137 = vadd.f32 0.0, %v136
    %v138 = vpop.f32.mrb[0].mxu0
    %v139 = vadd.f32 0.0, %v138
    %140 = vmatprep.mubr.f32.mxu0 0.0
    %141 = vmatmul.mubr.f32.gmra.mrb[0].mxu0 %v55
    %v142 = vpop.f32.mrb[0].mxu0
    %v143 = vadd.f32 0.0, %v142
    %v144 = vpop.f32.mrb[0].mxu0
    %v145 = vadd.f32 0.0, %v144
    %146 = vdwg.mxu0
    %147 = vmatprep.subr.mxu0 %v68
    %148 = vmatpush1.msra.mxu0 %v65
    %149 = vmatprep.subr.mxu0 0.0
    %150 = vmatpush1.msra.mxu0 0.0
    %151 = vmatprep.subr.mxu0 0.0
    %152 = vmatpush1.msra.mxu0 0.0
    %153 = vmatprep.subr.mxu0 0.0
    %154 = vmatpush1.msra.mxu0 0.0
    %155 = vmatprep.subr.mxu0 0.0
    %156 = vmatpush1.msra.mxu0 0.0
    %157 = vmatprep.subr.mxu0 0.0
    %158 = vmatpush1.msra.mxu0 0.0
    %159 = vmatprep.subr.mxu0 0.0
    %160 = vmatpush1.msra.mxu0 0.0
    %161 = vmatprep.subr.mxu0 0.0
    %162 = vmatpush1.msra.mxu0 0.0
    %163 = vmatprep.subr.mxu0 0.0
    %164 = vmatpush1.msra.mxu0 0.0
    %165 = vmatprep.subr.mxu0 0.0
    %166 = vmatpush1.msra.mxu0 0.0
    %167 = vmatprep.subr.mxu0 0.0
    %168 = vmatpush1.msra.mxu0 0.0
    %169 = vmatprep.subr.mxu0 0.0
    %170 = vmatpush1.msra.mxu0 0.0
    %171 = vmatprep.subr.mxu0 0.0
    %172 = vmatpush1.msra.mxu0 0.0
    %173 = vmatprep.subr.mxu0 0.0
    %174 = vmatpush1.msra.mxu0 0.0
    %175 = vmatprep.subr.mxu0 0.0
    %176 = vmatpush1.msra.mxu0 0.0
    %177 = vmatprep.subr.mxu0 0.0
    %178 = vmatpush1.msra.mxu0 0.0
    %179 = vmatprep.subr.mxu0 0.0
    %180 = vmatpush1.msra.mxu0 0.0
    %181 = vmatprep.subr.mxu0 0.0
    %182 = vmatpush1.msra.mxu0 0.0
    %183 = vmatprep.subr.mxu0 0.0
    %184 = vmatpush1.msra.mxu0 0.0
    %185 = vmatprep.subr.mxu0 0.0
    %186 = vmatpush1.msra.mxu0 0.0
    %187 = vmatprep.subr.mxu0 0.0
    %188 = vmatpush1.msra.mxu0 0.0
    %189 = vmatprep.subr.mxu0 0.0
    %190 = vmatpush1.msra.mxu0 0.0
    %191 = vmatprep.subr.mxu0 0.0
    %192 = vmatpush1.msra.mxu0 0.0
    %193 = vmatprep.subr.mxu0 0.0
    %194 = vmatpush1.msra.mxu0 0.0
    %195 = vmatprep.subr.mxu0 0.0
    %196 = vmatpush1.msra.mxu0 0.0
    %197 = vmatprep.subr.mxu0 0.0
    %198 = vmatpush1.msra.mxu0 0.0
    %199 = vmatprep.subr.mxu0 0.0
    %200 = vmatpush1.msra.mxu0 0.0
    %201 = vmatprep.subr.mxu0 0.0
    %202 = vmatpush1.msra.mxu0 0.0
    %203 = vmatprep.subr.mxu0 0.0
    %204 = vmatpush1.msra.mxu0 0.0
    %205 = vmatprep.subr.mxu0 0.0
    %206 = vmatpush1.msra.mxu0 0.0
    %207 = vmatprep.subr.mxu0 0.0
    %208 = vmatpush1.msra.mxu0 0.0
    %209 = vmatprep.subr.mxu0 0.0
    %210 = vmatpush1.msra.mxu0 0.0
    %211 = vmatprep.mubr.f32.mxu0 0.0
    %212 = vmatmul.mubr.f32.gmra.mrb[0].mxu0 %v52
    %v213 = vpop.f32.mrb[0].mxu0
    %v214 = vadd.f32 0.0, %v213
    %v215 = vpop.f32.mrb[0].mxu0
    %v216 = vadd.f32 0.0, %v215
    %217 = vmatprep.mubr.f32.mxu0 0.0
    %218 = vmatmul.mubr.f32.gmra.mrb[0].mxu0 %v55
    %v219 = vpop.f32.mrb[0].mxu0
    %v220 = vadd.f32 0.0, %v219
    %v221 = vpop.f32.mrb[0].mxu0
    %v222 = vadd.f32 0.0, %v221
    %223 = vdwg.mxu0
    %v224 = vmax.f32 %v137, 0.0
    %v225 = vmax.f32 %v139, 0.0
    %v226 = vmax.f32 %v214, 0.0
    %v227 = vmax.f32 %v216, 0.0
    %v228 = vmax.f32 %v143, 0.0
    %v229 = vmax.f32 %v145, 0.0
    %v230 = vmax.f32 %v220, 0.0
    %v231 = vmax.f32 %v222, 0.0
    %v232 = vmin.f32 %v224, 6.0
    %v233 = vmin.f32 %v225, 6.0
    %v234 = vmin.f32 %v226, 6.0
    %v235 = vmin.f32 %v227, 6.0
    %v236 = vmin.f32 %v228, 6.0
    %v237 = vmin.f32 %v229, 6.0
    %v238 = vmin.f32 %v230, 6.0
    %v239 = vmin.f32 %v231, 6.0
    %v240 = vlaneseq
    %v241 = vshrl.u32 %v240, 7
    %v242 = vadd.s32 %v241, 8
    %v243 = vlaneseq
    %v244 = vand.u32 %v243, 127
    %v245 = vadd.s32 %v241, 4294967295
    %v246 = vadd.s32 %v242, 4294967295
    %vm247 = vcmp.eq.s32.totalorder %v244, %v245
    %vm248 = vcmp.eq.s32.totalorder %v244, %v246
    %vm249 = vcmp.ne.s32.totalorder %v241, 0
    %vm250 = vcmp.ne.s32.totalorder %v242, 0
    %vm251 = vmand %vm247, %vm249
    %vm252 = vmand %vm248, %vm250
    %vm253 = vcmp.ne.s32.totalorder %v241, 4
    %vm254 = vcmp.ne.s32.totalorder %v242, 4
    %vm255 = vmand %vm251, %vm253
    %vm256 = vmand %vm252, %vm254
    %vm257 = vcmp.ne.s32.totalorder %v241, 8
    %vm258 = vcmp.ne.s32.totalorder %v242, 8
    %vm259 = vmand %vm255, %vm257
    %vm260 = vmand %vm256, %vm258
    %v261 = vsel %vm259, 1.0, 0.0
    %v262 = vsel %vm260, 1.0, 0.0
    %vm263 = vcmask 97280
    %v265 = vsel %vm263, %v261, 0
    %v268 = vsel %vm263, %v262, 0
    %vm270 = vcmask 1043456
    %v272 = vsel %vm270, %v236, 0
    %v275 = vsel %vm270, %v237, 0
    %v278 = vsel %vm270, %v238, 0
    %v281 = vsel %vm270, %v239, 0
    %283 = vmatprep.subr.mxu0 %v233
    %284 = vmatpush1.msra.mxu0 %v232
    %285 = vmatprep.subr.mxu0 %v275
    %286 = vmatpush1.msra.mxu0 %v272
    %287 = vmatprep.subr.mxu0 0.0
    %288 = vmatpush1.msra.mxu0 0.0
    %289 = vmatprep.subr.mxu0 0.0
    %290 = vmatpush1.msra.mxu0 0.0
    %291 = vmatprep.subr.mxu0 0.0
    %292 = vmatpush1.msra.mxu0 0.0
    %293 = vmatprep.subr.mxu0 0.0
    %294 = vmatpush1.msra.mxu0 0.0
    %295 = vmatprep.subr.mxu0 0.0
    %296 = vmatpush1.msra.mxu0 0.0
    %297 = vmatprep.subr.mxu0 0.0
    %298 = vmatpush1.msra.mxu0 0.0
    %299 = vmatprep.subr.mxu0 0.0
    %300 = vmatpush1.msra.mxu0 0.0
    %301 = vmatprep.subr.mxu0 0.0
    %302 = vmatpush1.msra.mxu0 0.0
    %303 = vmatprep.subr.mxu0 0.0
    %304 = vmatpush1.msra.mxu0 0.0
    %305 = vmatprep.subr.mxu0 0.0
    %306 = vmatpush1.msra.mxu0 0.0
    %307 = vmatprep.subr.mxu0 0.0
    %308 = vmatpush1.msra.mxu0 0.0
    %309 = vmatprep.subr.mxu0 0.0
    %310 = vmatpush1.msra.mxu0 0.0
    %311 = vmatprep.subr.mxu0 0.0
    %312 = vmatpush1.msra.mxu0 0.0
    %313 = vmatprep.subr.mxu0 0.0
    %314 = vmatpush1.msra.mxu0 0.0
    %315 = vmatprep.subr.mxu0 0.0
    %316 = vmatpush1.msra.mxu0 0.0
    %317 = vmatprep.subr.mxu0 0.0
    %318 = vmatpush1.msra.mxu0 0.0
    %319 = vmatprep.subr.mxu0 0.0
    %320 = vmatpush1.msra.mxu0 0.0
    %321 = vmatprep.subr.mxu0 0.0
    %322 = vmatpush1.msra.mxu0 0.0
    %323 = vmatprep.subr.mxu0 0.0
    %324 = vmatpush1.msra.mxu0 0.0
    %325 = vmatprep.subr.mxu0 0.0
    %326 = vmatpush1.msra.mxu0 0.0
    %327 = vmatprep.subr.mxu0 0.0
    %328 = vmatpush1.msra.mxu0 0.0
    %329 = vmatprep.subr.mxu0 0.0
    %330 = vmatpush1.msra.mxu0 0.0
    %331 = vmatprep.subr.mxu0 0.0
    %332 = vmatpush1.msra.mxu0 0.0
    %333 = vmatprep.subr.mxu0 0.0
    %334 = vmatpush1.msra.mxu0 0.0
    %335 = vmatprep.subr.mxu0 0.0
    %336 = vmatpush1.msra.mxu0 0.0
    %337 = vmatprep.subr.mxu0 0.0
    %338 = vmatpush1.msra.mxu0 0.0
    %339 = vmatprep.subr.mxu0 0.0
    %340 = vmatpush1.msra.mxu0 0.0
    %341 = vmatprep.subr.mxu0 0.0
    %342 = vmatpush1.msra.mxu0 0.0
    %343 = vmatprep.subr.mxu0 0.0
    %344 = vmatpush1.msra.mxu0 0.0
    %345 = vmatprep.subr.mxu0 0.0
    %346 = vmatpush1.msra.mxu0 0.0
    %347 = vmatprep.mubr.f32.mxu0 0.0
    %348 = vmatmul.mubr.f32.gmra.mrb[0].mxu0 %v265
    %v349 = vpop.f32.mrb[0].mxu0
    %v350 = vadd.f32 0.0, %v349
    %v351 = vpop.f32.mrb[0].mxu0
    %v352 = vadd.f32 0.0, %v351
    %353 = vmatprep.mubr.f32.mxu0 0.0
    %354 = vmatmul.mubr.f32.gmra.mrb[0].mxu0 %v268
    %v355 = vpop.f32.mrb[0].mxu0
    %v356 = vadd.f32 0.0, %v355
    %v357 = vpop.f32.mrb[0].mxu0
    %v358 = vadd.f32 0.0, %v357
    %359 = vdwg.mxu0
    %360 = vmatprep.subr.mxu0 %v235
    %361 = vmatpush1.msra.mxu0 %v234
    %362 = vmatprep.subr.mxu0 %v281
    %363 = vmatpush1.msra.mxu0 %v278
    %364 = vmatprep.subr.mxu0 0.0
    %365 = vmatpush1.msra.mxu0 0.0
    %366 = vmatprep.subr.mxu0 0.0
    %367 = vmatpush1.msra.mxu0 0.0
    %368 = vmatprep.subr.mxu0 0.0
    %369 = vmatpush1.msra.mxu0 0.0
    %370 = vmatprep.subr.mxu0 0.0
    %371 = vmatpush1.msra.mxu0 0.0
    %372 = vmatprep.subr.mxu0 0.0
    %373 = vmatpush1.msra.mxu0 0.0
    %374 = vmatprep.subr.mxu0 0.0
    %375 = vmatpush1.msra.mxu0 0.0
    %376 = vmatprep.subr.mxu0 0.0
    %377 = vmatpush1.msra.mxu0 0.0
    %378 = vmatprep.subr.mxu0 0.0
    %379 = vmatpush1.msra.mxu0 0.0
    %380 = vmatprep.subr.mxu0 0.0
    %381 = vmatpush1.msra.mxu0 0.0
    %382 = vmatprep.subr.mxu0 0.0
    %383 = vmatpush1.msra.mxu0 0.0
    %384 = vmatprep.subr.mxu0 0.0
    %385 = vmatpush1.msra.mxu0 0.0
    %386 = vmatprep.subr.mxu0 0.0
    %387 = vmatpush1.msra.mxu0 0.0
    %388 = vmatprep.subr.mxu0 0.0
    %389 = vmatpush1.msra.mxu0 0.0
    %390 = vmatprep.subr.mxu0 0.0
    %391 = vmatpush1.msra.mxu0 0.0
    %392 = vmatprep.subr.mxu0 0.0
    %393 = vmatpush1.msra.mxu0 0.0
    %394 = vmatprep.subr.mxu0 0.0
    %395 = vmatpush1.msra.mxu0 0.0
    %396 = vmatprep.subr.mxu0 0.0
    %397 = vmatpush1.msra.mxu0 0.0
    %398 = vmatprep.subr.mxu0 0.0
    %399 = vmatpush1.msra.mxu0 0.0
    %400 = vmatprep.subr.mxu0 0.0
    %401 = vmatpush1.msra.mxu0 0.0
    %402 = vmatprep.subr.mxu0 0.0
    %403 = vmatpush1.msra.mxu0 0.0
    %404 = vmatprep.subr.mxu0 0.0
    %405 = vmatpush1.msra.mxu0 0.0
    %406 = vmatprep.subr.mxu0 0.0
    %407 = vmatpush1.msra.mxu0 0.0
    %408 = vmatprep.subr.mxu0 0.0
    %409 = vmatpush1.msra.mxu0 0.0
    %410 = vmatprep.subr.mxu0 0.0
    %411 = vmatpush1.msra.mxu0 0.0
    %412 = vmatprep.subr.mxu0 0.0
    %413 = vmatpush1.msra.mxu0 0.0
    %414 = vmatprep.subr.mxu0 0.0
    %415 = vmatpush1.msra.mxu0 0.0
    %416 = vmatprep.subr.mxu0 0.0
    %417 = vmatpush1.msra.mxu0 0.0
    %418 = vmatprep.subr.mxu0 0.0
    %419 = vmatpush1.msra.mxu0 0.0
    %420 = vmatprep.subr.mxu0 0.0
    %421 = vmatpush1.msra.mxu0 0.0
    %422 = vmatprep.subr.mxu0 0.0
    %423 = vmatpush1.msra.mxu0 0.0
    %424 = vmatprep.mubr.f32.mxu0 0.0
    %425 = vmatmul.mubr.f32.gmra.mrb[0].mxu0 %v265
    %v426 = vpop.f32.mrb[0].mxu0
    %v427 = vadd.f32 0.0, %v426
    %v428 = vpop.f32.mrb[0].mxu0
    %v429 = vadd.f32 0.0, %v428
    %430 = vmatprep.mubr.f32.mxu0 0.0
    %431 = vmatmul.mubr.f32.gmra.mrb[0].mxu0 %v268
    %v432 = vpop.f32.mrb[0].mxu0
    %v433 = vadd.f32 0.0, %v432
    %v434 = vpop.f32.mrb[0].mxu0
    %v435 = vadd.f32 0.0, %v434
    %436 = vdwg.mxu0
    %437 = vrot.lane.b32.xlu0 %v350, 1
    %v438 = vpop.permute.xlu0 %437
    %439 = vrot.lane.b32.xlu0 %v356, 1
    %v440 = vpop.permute.xlu0 %439
    %441 = vrot.lane.b32.xlu0 %v352, 1
    %v442 = vpop.permute.xlu0 %441
    %443 = vrot.lane.b32.xlu0 %v358, 1
    %v444 = vpop.permute.xlu0 %443
    %445 = vrot.lane.b32.xlu0 %v427, 1
    %v446 = vpop.permute.xlu0 %445
    %447 = vrot.lane.b32.xlu0 %v433, 1
    %v448 = vpop.permute.xlu0 %447
    %449 = vrot.lane.b32.xlu0 %v429, 1
    %v450 = vpop.permute.xlu0 %449
    %451 = vrot.lane.b32.xlu0 %v435, 1
    %v452 = vpop.permute.xlu0 %451
    %vm453 = vcmp.lt.s32.totalorder %v244, 1
    %v454 = vsel %vm453, %v446, %v450
    %v455 = vsel %vm453, %v448, %v452
    %v456 = vsel %vm453, %v442, %v446
    %v457 = vsel %vm453, %v444, %v448
    %v458 = vsel %vm453, %v438, %v442
    %v459 = vsel %vm453, %v440, %v444
    %v460 = vsel %vm453, %v450, %v438
    %v461 = vsel %vm453, %v452, %v440
    %v462 = vld [vmem:[#allocation5] ss:$8 sm:$0xf]
    %v464 = vlaneseq
    %v465 = vshrl.u32 %v464, 7
    %v466 = vsub.s32 0, %v465
    %v467 = vrot.slane %v462, %v466
    %v468 = vlaneseq
    %v469 = vshrl.u32 %v468, 7
    %v470 = vsub.s32 1, %v469
    %v471 = vrot.slane %v462, %v470
    %v472 = vlaneseq
    %v473 = vshrl.u32 %v472, 7
    %v474 = vsub.s32 2, %v473
    %v475 = vrot.slane %v462, %v474
    %v476 = vlaneseq
    %v477 = vshrl.u32 %v476, 7
    %v478 = vsub.s32 3, %v477
    %v479 = vrot.slane %v462, %v478
    %v484 = vmul.f32 %v467, %v460
    %v485 = vmul.f32 %v471, %v458
    %v486 = vmul.f32 %v475, %v456
    %v487 = vmul.f32 %v479, %v454
    %v488 = vmul.f32 %v467, %v461
    %v489 = vmul.f32 %v471, %v459
    %v490 = vmul.f32 %v475, %v457
    %v491 = vmul.f32 %v479, %v455
    %s492 = scalar_lea.vmem [#allocation5], 1
    %v493 = vld [vmem:[%s492] ss:$8 sm:$0xf]
    %v495 = vlaneseq
    %v496 = vshrl.u32 %v495, 7
    %v497 = vsub.s32 0, %v496
    %v498 = vrot.slane %v493, %v497
    %v499 = vlaneseq
    %v500 = vshrl.u32 %v499, 7
    %v501 = vsub.s32 1, %v500
    %v502 = vrot.slane %v493, %v501
    %v503 = vlaneseq
    %v504 = vshrl.u32 %v503, 7
    %v505 = vsub.s32 2, %v504
    %v506 = vrot.slane %v493, %v505
    %v507 = vlaneseq
    %v508 = vshrl.u32 %v507, 7
    %v509 = vsub.s32 3, %v508
    %v510 = vrot.slane %v493, %v509
    %v515 = vmul.f32 %v498, %v350
    %v516 = vmul.f32 %v502, %v352
    %v517 = vmul.f32 %v506, %v427
    %v518 = vmul.f32 %v510, %v429
    %v519 = vmul.f32 %v498, %v356
    %v520 = vmul.f32 %v502, %v358
    %v521 = vmul.f32 %v506, %v433
    %v522 = vmul.f32 %v510, %v435
    %v523 = vadd.f32 %v484, %v515
    %v524 = vadd.f32 %v485, %v516
    %v525 = vadd.f32 %v486, %v517
    %v526 = vadd.f32 %v487, %v518
    %v527 = vadd.f32 %v488, %v519
    %v528 = vadd.f32 %v489, %v520
    %v529 = vadd.f32 %v490, %v521
    %v530 = vadd.f32 %v491, %v522
    %531 = vrot.lane.b32.xlu0 %v350, 127
    %v532 = vpop.permute.xlu0 %531
    %533 = vrot.lane.b32.xlu0 %v356, 127
    %v534 = vpop.permute.xlu0 %533
    %535 = vrot.lane.b32.xlu0 %v352, 127
    %v536 = vpop.permute.xlu0 %535
    %537 = vrot.lane.b32.xlu0 %v358, 127
    %v538 = vpop.permute.xlu0 %537
    %539 = vrot.lane.b32.xlu0 %v427, 127
    %v540 = vpop.permute.xlu0 %539
    %541 = vrot.lane.b32.xlu0 %v433, 127
    %v542 = vpop.permute.xlu0 %541
    %543 = vrot.lane.b32.xlu0 %v429, 127
    %v544 = vpop.permute.xlu0 %543
    %545 = vrot.lane.b32.xlu0 %v435, 127
    %v546 = vpop.permute.xlu0 %545
    %vm547 = vcmp.lt.s32.totalorder %v244, 127
    %v548 = vsel %vm547, %v540, %v544
    %v549 = vsel %vm547, %v542, %v546
    %v550 = vsel %vm547, %v536, %v540
    %v551 = vsel %vm547, %v538, %v542
    %v552 = vsel %vm547, %v532, %v536
    %v553 = vsel %vm547, %v534, %v538
    %v554 = vsel %vm547, %v544, %v532
    %v555 = vsel %vm547, %v546, %v534
    %s556 = scalar_lea.vmem [#allocation5], 2
    %v557 = vld [vmem:[%s556] ss:$8 sm:$0xf]
    %v559 = vlaneseq
    %v560 = vshrl.u32 %v559, 7
    %v561 = vsub.s32 0, %v560
    %v562 = vrot.slane %v557, %v561
    %v563 = vlaneseq
    %v564 = vshrl.u32 %v563, 7
    %v565 = vsub.s32 1, %v564
    %v566 = vrot.slane %v557, %v565
    %v567 = vlaneseq
    %v568 = vshrl.u32 %v567, 7
    %v569 = vsub.s32 2, %v568
    %v570 = vrot.slane %v557, %v569
    %v571 = vlaneseq
    %v572 = vshrl.u32 %v571, 7
    %v573 = vsub.s32 3, %v572
    %v574 = vrot.slane %v557, %v573
    %v579 = vmul.f32 %v562, %v552
    %v580 = vmul.f32 %v566, %v550
    %v581 = vmul.f32 %v570, %v548
    %v582 = vmul.f32 %v574, %v554
    %v583 = vmul.f32 %v562, %v553
    %v584 = vmul.f32 %v566, %v551
    %v585 = vmul.f32 %v570, %v549
    %v586 = vmul.f32 %v574, %v555
    %v587 = vadd.f32 %v523, %v579
    %v588 = vadd.f32 %v524, %v580
    %v589 = vadd.f32 %v525, %v581
    %v590 = vadd.f32 %v526, %v582
    %v591 = vadd.f32 %v527, %v583
    %v592 = vadd.f32 %v528, %v584
    %v593 = vadd.f32 %v529, %v585
    %v594 = vadd.f32 %v530, %v586
    %595 = vrot.lane.b32.xlu0 %v232, 1
    %v596 = vpop.permute.xlu0 %595
    %597 = vrot.lane.b32.xlu0 %v236, 1
    %v598 = vpop.permute.xlu0 %597
    %599 = vrot.lane.b32.xlu0 %v233, 1
    %v600 = vpop.permute.xlu0 %599
    %601 = vrot.lane.b32.xlu0 %v237, 1
    %v602 = vpop.permute.xlu0 %601
    %603 = vrot.lane.b32.xlu0 %v234, 1
    %v604 = vpop.permute.xlu0 %603
    %605 = vrot.lane.b32.xlu0 %v238, 1
    %v606 = vpop.permute.xlu0 %605
    %607 = vrot.lane.b32.xlu0 %v235, 1
    %v608 = vpop.permute.xlu0 %607
    %609 = vrot.lane.b32.xlu0 %v239, 1
    %v610 = vpop.permute.xlu0 %609
    %v611 = vsel %vm453, %v604, %v608
    %v612 = vsel %vm453, %v606, %v610
    %v613 = vsel %vm453, %v600, %v604
    %v614 = vsel %vm453, %v602, %v606
    %v615 = vsel %vm453, %v596, %v600
    %v616 = vsel %vm453, %v598, %v602
    %v617 = vsel %vm453, %v608, %v596
    %v618 = vsel %vm453, %v610, %v598
    %s619 = scalar_lea.vmem [#allocation5], 3
    %v620 = vld [vmem:[%s619] ss:$8 sm:$0xf]
    %v622 = vlaneseq
    %v623 = vshrl.u32 %v622, 7
    %v624 = vsub.s32 0, %v623
    %v625 = vrot.slane %v620, %v624
    %v626 = vlaneseq
    %v627 = vshrl.u32 %v626, 7
    %v628 = vsub.s32 1, %v627
    %v629 = vrot.slane %v620, %v628
    %v630 = vlaneseq
    %v631 = vshrl.u32 %v630, 7
    %v632 = vsub.s32 2, %v631
    %v633 = vrot.slane %v620, %v632
    %v634 = vlaneseq
    %v635 = vshrl.u32 %v634, 7
    %v636 = vsub.s32 3, %v635
    %v637 = vrot.slane %v620, %v636
    %v642 = vmul.f32 %v625, %v617
    %v643 = vmul.f32 %v629, %v615
    %v644 = vmul.f32 %v633, %v613
    %v645 = vmul.f32 %v637, %v611
    %v646 = vmul.f32 %v625, %v618
    %v647 = vmul.f32 %v629, %v616
    %v648 = vmul.f32 %v633, %v614
    %v649 = vmul.f32 %v637, %v612
    %v650 = vadd.f32 %v587, %v642
    %v651 = vadd.f32 %v588, %v643
    %v652 = vadd.f32 %v589, %v644
    %v653 = vadd.f32 %v590, %v645
    %v654 = vadd.f32 %v591, %v646
    %v655 = vadd.f32 %v592, %v647
    %v656 = vadd.f32 %v593, %v648
    %v657 = vadd.f32 %v594, %v649
    %s658 = scalar_lea.vmem [#allocation5], 4
    %v659 = vld [vmem:[%s658] ss:$8 sm:$0xf]
    %v661 = vlaneseq
    %v662 = vshrl.u32 %v661, 7
    %v663 = vsub.s32 0, %v662
    %v664 = vrot.slane %v659, %v663
    %v665 = vlaneseq
    %v666 = vshrl.u32 %v665, 7
    %v667 = vsub.s32 1, %v666
    %v668 = vrot.slane %v659, %v667
    %v669 = vlaneseq
    %v670 = vshrl.u32 %v669, 7
    %v671 = vsub.s32 2, %v670
    %v672 = vrot.slane %v659, %v671
    %v673 = vlaneseq
    %v674 = vshrl.u32 %v673, 7
    %v675 = vsub.s32 3, %v674
    %v676 = vrot.slane %v659, %v675
    %v681 = vmul.f32 %v664, %v232
    %v682 = vmul.f32 %v668, %v233
    %v683 = vmul.f32 %v672, %v234
    %v684 = vmul.f32 %v676, %v235
    %v685 = vmul.f32 %v664, %v236
    %v686 = vmul.f32 %v668, %v237
    %v687 = vmul.f32 %v672, %v238
    %v688 = vmul.f32 %v676, %v239
    %v689 = vadd.f32 %v650, %v681
    %v690 = vadd.f32 %v651, %v682
    %v691 = vadd.f32 %v652, %v683
    %v692 = vadd.f32 %v653, %v684
    %v693 = vadd.f32 %v654, %v685
    %v694 = vadd.f32 %v655, %v686
    %v695 = vadd.f32 %v656, %v687
    %v696 = vadd.f32 %v657, %v688
    %697 = vrot.lane.b32.xlu0 %v232, 127
    %v698 = vpop.permute.xlu0 %697
    %699 = vrot.lane.b32.xlu0 %v236, 127
    %v700 = vpop.permute.xlu0 %699
    %701 = vrot.lane.b32.xlu0 %v233, 127
    %v702 = vpop.permute.xlu0 %701
    %703 = vrot.lane.b32.xlu0 %v237, 127
    %v704 = vpop.permute.xlu0 %703
    %705 = vrot.lane.b32.xlu0 %v234, 127
    %v706 = vpop.permute.xlu0 %705
    %707 = vrot.lane.b32.xlu0 %v238, 127
    %v708 = vpop.permute.xlu0 %707
    %709 = vrot.lane.b32.xlu0 %v235, 127
    %v710 = vpop.permute.xlu0 %709
    %711 = vrot.lane.b32.xlu0 %v239, 127
    %v712 = vpop.permute.xlu0 %711
    %v713 = vsel %vm547, %v706, %v710
    %v714 = vsel %vm547, %v708, %v712
    %v715 = vsel %vm547, %v702, %v706
    %v716 = vsel %vm547, %v704, %v708
    %v717 = vsel %vm547, %v698, %v702
    %v718 = vsel %vm547, %v700, %v704
    %v719 = vsel %vm547, %v710, %v698
    %v720 = vsel %vm547, %v712, %v700
    %s721 = scalar_lea.vmem [#allocation5], 5
    %v722 = vld [vmem:[%s721] ss:$8 sm:$0xf]
    %v724 = vlaneseq
    %v725 = vshrl.u32 %v724, 7
    %v726 = vsub.s32 0, %v725
    %v727 = vrot.slane %v722, %v726
    %v728 = vlaneseq
    %v729 = vshrl.u32 %v728, 7
    %v730 = vsub.s32 1, %v729
    %v731 = vrot.slane %v722, %v730
    %v732 = vlaneseq
    %v733 = vshrl.u32 %v732, 7
    %v734 = vsub.s32 2, %v733
    %v735 = vrot.slane %v722, %v734
    %v736 = vlaneseq
    %v737 = vshrl.u32 %v736, 7
    %v738 = vsub.s32 3, %v737
    %v739 = vrot.slane %v722, %v738
    %v744 = vmul.f32 %v727, %v717
    %v745 = vmul.f32 %v731, %v715
    %v746 = vmul.f32 %v735, %v713
    %v747 = vmul.f32 %v739, %v719
    %v748 = vmul.f32 %v727, %v718
    %v749 = vmul.f32 %v731, %v716
    %v750 = vmul.f32 %v735, %v714
    %v751 = vmul.f32 %v739, %v720
    %v752 = vadd.f32 %v689, %v744
    %v753 = vadd.f32 %v690, %v745
    %v754 = vadd.f32 %v691, %v746
    %v755 = vadd.f32 %v692, %v747
    %v756 = vadd.f32 %v693, %v748
    %v757 = vadd.f32 %v694, %v749
    %v758 = vadd.f32 %v695, %v750
    %v759 = vadd.f32 %v696, %v751
    %v760 = vadd.s32 %v241, 1
    %v761 = vadd.s32 %v242, 1
    %vm762 = vcmp.eq.s32.totalorder %v244, %v760
    %vm763 = vcmp.eq.s32.totalorder %v244, %v761
    %vm764 = vcmp.ne.s32.totalorder %v241, 3
    %vm765 = vcmp.ne.s32.totalorder %v242, 3
    %vm766 = vmand %vm762, %vm764
    %vm767 = vmand %vm763, %vm765
    %vm768 = vcmp.ne.s32.totalorder %v241, 7
    %vm769 = vcmp.ne.s32.totalorder %v242, 7
    %vm770 = vmand %vm766, %vm768
    %vm771 = vmand %vm767, %vm769
    %vm772 = vcmp.ne.s32.totalorder %v241, 11
    %vm773 = vcmp.ne.s32.totalorder %v242, 11
    %vm774 = vmand %vm770, %vm772
    %vm775 = vmand %vm771, %vm773
    %v776 = vsel %vm774, 1.0, 0.0
    %v777 = vsel %vm775, 1.0, 0.0
    %v779 = vsel %vm263, %v776, 0
    %v782 = vsel %vm263, %v777, 0
    %784 = vmatprep.subr.mxu0 %v233
    %785 = vmatpush1.msra.mxu0 %v232
    %786 = vmatprep.subr.mxu0 %v275
    %787 = vmatpush1.msra.mxu0 %v272
    %788 = vmatprep.subr.mxu0 0.0
    %789 = vmatpush1.msra.mxu0 0.0
    %790 = vmatprep.subr.mxu0 0.0
    %791 = vmatpush1.msra.mxu0 0.0
    %792 = vmatprep.subr.mxu0 0.0
    %793 = vmatpush1.msra.mxu0 0.0
    %794 = vmatprep.subr.mxu0 0.0
    %795 = vmatpush1.msra.mxu0 0.0
    %796 = vmatprep.subr.mxu0 0.0
    %797 = vmatpush1.msra.mxu0 0.0
    %798 = vmatprep.subr.mxu0 0.0
    %799 = vmatpush1.msra.mxu0 0.0
    %800 = vmatprep.subr.mxu0 0.0
    %801 = vmatpush1.msra.mxu0 0.0
    %802 = vmatprep.subr.mxu0 0.0
    %803 = vmatpush1.msra.mxu0 0.0
    %804 = vmatprep.subr.mxu0 0.0
    %805 = vmatpush1.msra.mxu0 0.0
    %806 = vmatprep.subr.mxu0 0.0
    %807 = vmatpush1.msra.mxu0 0.0
    %808 = vmatprep.subr.mxu0 0.0
    %809 = vmatpush1.msra.mxu0 0.0
    %810 = vmatprep.subr.mxu0 0.0
    %811 = vmatpush1.msra.mxu0 0.0
    %812 = vmatprep.subr.mxu0 0.0
    %813 = vmatpush1.msra.mxu0 0.0
    %814 = vmatprep.subr.mxu0 0.0
    %815 = vmatpush1.msra.mxu0 0.0
    %816 = vmatprep.subr.mxu0 0.0
    %817 = vmatpush1.msra.mxu0 0.0
    %818 = vmatprep.subr.mxu0 0.0
    %819 = vmatpush1.msra.mxu0 0.0
    %820 = vmatprep.subr.mxu0 0.0
    %821 = vmatpush1.msra.mxu0 0.0
    %822 = vmatprep.subr.mxu0 0.0
    %823 = vmatpush1.msra.mxu0 0.0
    %824 = vmatprep.subr.mxu0 0.0
    %825 = vmatpush1.msra.mxu0 0.0
    %826 = vmatprep.subr.mxu0 0.0
    %827 = vmatpush1.msra.mxu0 0.0
    %828 = vmatprep.subr.mxu0 0.0
    %829 = vmatpush1.msra.mxu0 0.0
    %830 = vmatprep.subr.mxu0 0.0
    %831 = vmatpush1.msra.mxu0 0.0
    %832 = vmatprep.subr.mxu0 0.0
    %833 = vmatpush1.msra.mxu0 0.0
    %834 = vmatprep.subr.mxu0 0.0
    %835 = vmatpush1.msra.mxu0 0.0
    %836 = vmatprep.subr.mxu0 0.0
    %837 = vmatpush1.msra.mxu0 0.0
    %838 = vmatprep.subr.mxu0 0.0
    %839 = vmatpush1.msra.mxu0 0.0
    %840 = vmatprep.subr.mxu0 0.0
    %841 = vmatpush1.msra.mxu0 0.0
    %842 = vmatprep.subr.mxu0 0.0
    %843 = vmatpush1.msra.mxu0 0.0
    %844 = vmatprep.subr.mxu0 0.0
    %845 = vmatpush1.msra.mxu0 0.0
    %846 = vmatprep.subr.mxu0 0.0
    %847 = vmatpush1.msra.mxu0 0.0
    %848 = vmatprep.mubr.f32.mxu0 0.0
    %849 = vmatmul.mubr.f32.gmra.mrb[0].mxu0 %v779
    %v850 = vpop.f32.mrb[0].mxu0
    %v851 = vadd.f32 0.0, %v850
    %v852 = vpop.f32.mrb[0].mxu0
    %v853 = vadd.f32 0.0, %v852
    %854 = vmatprep.mubr.f32.mxu0 0.0
    %855 = vmatmul.mubr.f32.gmra.mrb[0].mxu0 %v782
    %v856 = vpop.f32.mrb[0].mxu0
    %v857 = vadd.f32 0.0, %v856
    %v858 = vpop.f32.mrb[0].mxu0
    %v859 = vadd.f32 0.0, %v858
    %860 = vdwg.mxu0
    %861 = vmatprep.subr.mxu0 %v235
    %862 = vmatpush1.msra.mxu0 %v234
    %863 = vmatprep.subr.mxu0 %v281
    %864 = vmatpush1.msra.mxu0 %v278
    %865 = vmatprep.subr.mxu0 0.0
    %866 = vmatpush1.msra.mxu0 0.0
    %867 = vmatprep.subr.mxu0 0.0
    %868 = vmatpush1.msra.mxu0 0.0
    %869 = vmatprep.subr.mxu0 0.0
    %870 = vmatpush1.msra.mxu0 0.0
    %871 = vmatprep.subr.mxu0 0.0
    %872 = vmatpush1.msra.mxu0 0.0
    %873 = vmatprep.subr.mxu0 0.0
    %874 = vmatpush1.msra.mxu0 0.0
    %875 = vmatprep.subr.mxu0 0.0
    %876 = vmatpush1.msra.mxu0 0.0
    %877 = vmatprep.subr.mxu0 0.0
    %878 = vmatpush1.msra.mxu0 0.0
    %879 = vmatprep.subr.mxu0 0.0
    %880 = vmatpush1.msra.mxu0 0.0
    %881 = vmatprep.subr.mxu0 0.0
    %882 = vmatpush1.msra.mxu0 0.0
    %883 = vmatprep.subr.mxu0 0.0
    %884 = vmatpush1.msra.mxu0 0.0
    %885 = vmatprep.subr.mxu0 0.0
    %886 = vmatpush1.msra.mxu0 0.0
    %887 = vmatprep.subr.mxu0 0.0
    %888 = vmatpush1.msra.mxu0 0.0
    %889 = vmatprep.subr.mxu0 0.0
    %890 = vmatpush1.msra.mxu0 0.0
    %891 = vmatprep.subr.mxu0 0.0
    %892 = vmatpush1.msra.mxu0 0.0
    %893 = vmatprep.subr.mxu0 0.0
    %894 = vmatpush1.msra.mxu0 0.0
    %895 = vmatprep.subr.mxu0 0.0
    %896 = vmatpush1.msra.mxu0 0.0
    %897 = vmatprep.subr.mxu0 0.0
    %898 = vmatpush1.msra.mxu0 0.0
    %899 = vmatprep.subr.mxu0 0.0
    %900 = vmatpush1.msra.mxu0 0.0
    %901 = vmatprep.subr.mxu0 0.0
    %902 = vmatpush1.msra.mxu0 0.0
    %903 = vmatprep.subr.mxu0 0.0
    %904 = vmatpush1.msra.mxu0 0.0
    %905 = vmatprep.subr.mxu0 0.0
    %906 = vmatpush1.msra.mxu0 0.0
    %907 = vmatprep.subr.mxu0 0.0
    %908 = vmatpush1.msra.mxu0 0.0
    %909 = vmatprep.subr.mxu0 0.0
    %910 = vmatpush1.msra.mxu0 0.0
    %911 = vmatprep.subr.mxu0 0.0
    %912 = vmatpush1.msra.mxu0 0.0
    %913 = vmatprep.subr.mxu0 0.0
    %914 = vmatpush1.msra.mxu0 0.0
    %915 = vmatprep.subr.mxu0 0.0
    %916 = vmatpush1.msra.mxu0 0.0
    %917 = vmatprep.subr.mxu0 0.0
    %918 = vmatpush1.msra.mxu0 0.0
    %919 = vmatprep.subr.mxu0 0.0
    %920 = vmatpush1.msra.mxu0 0.0
    %921 = vmatprep.subr.mxu0 0.0
    %922 = vmatpush1.msra.mxu0 0.0
    %923 = vmatprep.subr.mxu0 0.0
    %924 = vmatpush1.msra.mxu0 0.0
    %925 = vmatprep.mubr.f32.mxu0 0.0
    %926 = vmatmul.mubr.f32.gmra.mrb[0].mxu0 %v779
    %v927 = vpop.f32.mrb[0].mxu0
    %v928 = vadd.f32 0.0, %v927
    %v929 = vpop.f32.mrb[0].mxu0
    %v930 = vadd.f32 0.0, %v929
    %931 = vmatprep.mubr.f32.mxu0 0.0
    %932 = vmatmul.mubr.f32.gmra.mrb[0].mxu0 %v782
    %v933 = vpop.f32.mrb[0].mxu0
    %v934 = vadd.f32 0.0, %v933
    %v935 = vpop.f32.mrb[0].mxu0
    %v936 = vadd.f32 0.0, %v935
    %937 = vdwg.mxu0
    %938 = vrot.lane.b32.xlu0 %v851, 1
    %v939 = vpop.permute.xlu0 %938
    %940 = vrot.lane.b32.xlu0 %v857, 1
    %v941 = vpop.permute.xlu0 %940
    %942 = vrot.lane.b32.xlu0 %v853, 1
    %v943 = vpop.permute.xlu0 %942
    %944 = vrot.lane.b32.xlu0 %v859, 1
    %v945 = vpop.permute.xlu0 %944
    %946 = vrot.lane.b32.xlu0 %v928, 1
    %v947 = vpop.permute.xlu0 %946
    %948 = vrot.lane.b32.xlu0 %v934, 1
    %v949 = vpop.permute.xlu0 %948
    %950 = vrot.lane.b32.xlu0 %v930, 1
    %v951 = vpop.permute.xlu0 %950
    %952 = vrot.lane.b32.xlu0 %v936, 1
    %v953 = vpop.permute.xlu0 %952
    %v954 = vsel %vm453, %v947, %v951
    %v955 = vsel %vm453, %v949, %v953
    %v956 = vsel %vm453, %v943, %v947
    %v957 = vsel %vm453, %v945, %v949
    %v958 = vsel %vm453, %v939, %v943
    %v959 = vsel %vm453, %v941, %v945
    %v960 = vsel %vm453, %v951, %v939
    %v961 = vsel %vm453, %v953, %v941
    %s962 = scalar_lea.vmem [#allocation5], 6
    %v963 = vld [vmem:[%s962] ss:$8 sm:$0xf]
    %v965 = vlaneseq
    %v966 = vshrl.u32 %v965, 7
    %v967 = vsub.s32 0, %v966
    %v968 = vrot.slane %v963, %v967
    %v969 = vlaneseq
    %v970 = vshrl.u32 %v969, 7
    %v971 = vsub.s32 1, %v970
    %v972 = vrot.slane %v963, %v971
    %v973 = vlaneseq
    %v974 = vshrl.u32 %v973, 7
    %v975 = vsub.s32 2, %v974
    %v976 = vrot.slane %v963, %v975
    %v977 = vlaneseq
    %v978 = vshrl.u32 %v977, 7
    %v979 = vsub.s32 3, %v978
    %v980 = vrot.slane %v963, %v979
    %v985 = vmul.f32 %v968, %v960
    %v986 = vmul.f32 %v972, %v958
    %v987 = vmul.f32 %v976, %v956
    %v988 = vmul.f32 %v980, %v954
    %v989 = vmul.f32 %v968, %v961
    %v990 = vmul.f32 %v972, %v959
    %v991 = vmul.f32 %v976, %v957
    %v992 = vmul.f32 %v980, %v955
    %v993 = vadd.f32 %v752, %v985
    %v994 = vadd.f32 %v753, %v986
    %v995 = vadd.f32 %v754, %v987
    %v996 = vadd.f32 %v755, %v988
    %v997 = vadd.f32 %v756, %v989
    %v998 = vadd.f32 %v757, %v990
    %v999 = vadd.f32 %v758, %v991
    %v1000 = vadd.f32 %v759, %v992
    %s1001 = scalar_lea.vmem [#allocation5], 7
    %v1002 = vld [vmem:[%s1001] ss:$8 sm:$0xf]
    %v1004 = vlaneseq
    %v1005 = vshrl.u32 %v1004, 7
    %v1006 = vsub.s32 0, %v1005
    %v1007 = vrot.slane %v1002, %v1006
    %v1008 = vlaneseq
    %v1009 = vshrl.u32 %v1008, 7
    %v1010 = vsub.s32 1, %v1009
    %v1011 = vrot.slane %v1002, %v1010
    %v1012 = vlaneseq
    %v1013 = vshrl.u32 %v1012, 7
    %v1014 = vsub.s32 2, %v1013
    %v1015 = vrot.slane %v1002, %v1014
    %v1016 = vlaneseq
    %v1017 = vshrl.u32 %v1016, 7
    %v1018 = vsub.s32 3, %v1017
    %v1019 = vrot.slane %v1002, %v1018
    %v1024 = vmul.f32 %v1007, %v851
    %v1025 = vmul.f32 %v1011, %v853
    %v1026 = vmul.f32 %v1015, %v928
    %v1027 = vmul.f32 %v1019, %v930
    %v1028 = vmul.f32 %v1007, %v857
    %v1029 = vmul.f32 %v1011, %v859
    %v1030 = vmul.f32 %v1015, %v934
    %v1031 = vmul.f32 %v1019, %v936
    %v1032 = vadd.f32 %v993, %v1024
    %v1033 = vadd.f32 %v994, %v1025
    %v1034 = vadd.f32 %v995, %v1026
    %v1035 = vadd.f32 %v996, %v1027
    %v1036 = vadd.f32 %v997, %v1028
    %v1037 = vadd.f32 %v998, %v1029
    %v1038 = vadd.f32 %v999, %v1030
    %v1039 = vadd.f32 %v1000, %v1031
    %1040 = vrot.lane.b32.xlu0 %v851, 127
    %v1041 = vpop.permute.xlu0 %1040
    %1042 = vrot.lane.b32.xlu0 %v857, 127
    %v1043 = vpop.permute.xlu0 %1042
    %1044 = vrot.lane.b32.xlu0 %v853, 127
    %v1045 = vpop.permute.xlu0 %1044
    %1046 = vrot.lane.b32.xlu0 %v859, 127
    %v1047 = vpop.permute.xlu0 %1046
    %1048 = vrot.lane.b32.xlu0 %v928, 127
    %v1049 = vpop.permute.xlu0 %1048
    %1050 = vrot.lane.b32.xlu0 %v934, 127
    %v1051 = vpop.permute.xlu0 %1050
    %1052 = vrot.lane.b32.xlu0 %v930, 127
    %v1053 = vpop.permute.xlu0 %1052
    %1054 = vrot.lane.b32.xlu0 %v936, 127
    %v1055 = vpop.permute.xlu0 %1054
    %v1056 = vsel %vm547, %v1049, %v1053
    %v1057 = vsel %vm547, %v1051, %v1055
    %v1058 = vsel %vm547, %v1045, %v1049
    %v1059 = vsel %vm547, %v1047, %v1051
    %v1060 = vsel %vm547, %v1041, %v1045
    %v1061 = vsel %vm547, %v1043, %v1047
    %v1062 = vsel %vm547, %v1053, %v1041
    %v1063 = vsel %vm547, %v1055, %v1043
    %s1064 = scalar_lea.vmem [#allocation5], 32
    %v1065 = vld [vmem:[%s1064] ss:$8 sm:$0xf]
    %v1067 = vlaneseq
    %v1068 = vshrl.u32 %v1067, 7
    %v1069 = vsub.s32 0, %v1068
    %v1070 = vrot.slane %v1065, %v1069
    %v1071 = vlaneseq
    %v1072 = vshrl.u32 %v1071, 7
    %v1073 = vsub.s32 1, %v1072
    %v1074 = vrot.slane %v1065, %v1073
    %v1075 = vlaneseq
    %v1076 = vshrl.u32 %v1075, 7
    %v1077 = vsub.s32 2, %v1076
    %v1078 = vrot.slane %v1065, %v1077
    %v1079 = vlaneseq
    %v1080 = vshrl.u32 %v1079, 7
    %v1081 = vsub.s32 3, %v1080
    %v1082 = vrot.slane %v1065, %v1081
    %v1087 = vmul.f32 %v1070, %v1060
    %v1088 = vmul.f32 %v1074, %v1058
    %v1089 = vmul.f32 %v1078, %v1056
    %v1090 = vmul.f32 %v1082, %v1062
    %v1091 = vmul.f32 %v1070, %v1061
    %v1092 = vmul.f32 %v1074, %v1059
    %v1093 = vmul.f32 %v1078, %v1057
    %v1094 = vmul.f32 %v1082, %v1063
    %v1095 = vadd.f32 %v1032, %v1087
    %v1096 = vadd.f32 %v1033, %v1088
    %v1097 = vadd.f32 %v1034, %v1089
    %v1098 = vadd.f32 %v1035, %v1090
    %v1099 = vadd.f32 %v1036, %v1091
    %v1100 = vadd.f32 %v1037, %v1092
    %v1101 = vadd.f32 %v1038, %v1093
    %v1102 = vadd.f32 %v1039, %v1094
    %s1103 = scalar_lea.vmem [#allocation5], 33
    %v1104 = vld [vmem:[%s1103] ss:$8 sm:$0xf]
    %v1106 = vlaneseq
    %v1107 = vshrl.u32 %v1106, 7
    %v1108 = vsub.s32 0, %v1107
    %v1109 = vrot.slane %v1104, %v1108
    %v1110 = vlaneseq
    %v1111 = vshrl.u32 %v1110, 7
    %v1112 = vsub.s32 1, %v1111
    %v1113 = vrot.slane %v1104, %v1112
    %v1114 = vlaneseq
    %v1115 = vshrl.u32 %v1114, 7
    %v1116 = vsub.s32 2, %v1115
    %v1117 = vrot.slane %v1104, %v1116
    %v1118 = vlaneseq
    %v1119 = vshrl.u32 %v1118, 7
    %v1120 = vsub.s32 3, %v1119
    %v1121 = vrot.slane %v1104, %v1120
    %v1126 = vadd.f32 %v1095, %v1109
    %v1127 = vadd.f32 %v1096, %v1113
    %v1128 = vadd.f32 %v1097, %v1117
    %v1129 = vadd.f32 %v1098, %v1121
    %v1130 = vadd.f32 %v1099, %v1109
    %v1131 = vadd.f32 %v1100, %v1113
    %v1132 = vadd.f32 %v1101, %v1117
    %v1133 = vadd.f32 %v1102, %v1121
    %v1134 = vmax.f32 %v1126, 0.0
    %v1135 = vmax.f32 %v1127, 0.0
    %v1136 = vmax.f32 %v1128, 0.0
    %v1137 = vmax.f32 %v1129, 0.0
    %v1138 = vmax.f32 %v1130, 0.0
    %v1139 = vmax.f32 %v1131, 0.0
    %v1140 = vmax.f32 %v1132, 0.0
    %v1141 = vmax.f32 %v1133, 0.0
    %v1142 = vmin.f32 %v1134, 6.0
    %v1143 = vmin.f32 %v1135, 6.0
    %v1144 = vmin.f32 %v1136, 6.0
    %v1145 = vmin.f32 %v1137, 6.0
    %v1146 = vmin.f32 %v1138, 6.0
    %v1147 = vmin.f32 %v1139, 6.0
    %v1148 = vmin.f32 %v1140, 6.0
    %v1149 = vmin.f32 %v1141, 6.0
    %v1150 = vadd.f32 %v1142, %v232
    %v1151 = vadd.f32 %v1143, %v233
    %v1152 = vadd.f32 %v1144, %v234
    %v1153 = vadd.f32 %v1145, %v235
    %v1154 = vadd.f32 %v1146, %v236
    %v1155 = vadd.f32 %v1147, %v237
    %v1156 = vadd.f32 %v1148, %v238
    %v1157 = vadd.f32 %v1149, %v239
    %v1158 = vld [vmem:[%s3] sm:$0x3f]
    %v1159 = vld [vmem:[#allocation5 + $0x20] sm:$0xfc]
    %v1160 = vld [vmem:[#allocation5 + $0x28] sm:$0xfc]
    %v1161 = vld [vmem:[#allocation5 + $0x30] sm:$0xfc]
    %v1162 = vld [vmem:[#allocation5 + $0x38] sm:$0xfc]
    %v1167 = vrot.slane %v1159, 2
    %v1168 = vrot.slane %v1160, 2
    %v1169 = vrot.slane %v1161, 2
    %v1170 = vrot.slane %v1162, 2
    %v1176 = vsel %vm263, %v1158, 0
    %v1179 = vsel %vm270, %v1154, 0
    %v1182 = vsel %vm270, %v1155, 0
    %v1185 = vsel %vm270, %v1156, 0
    %v1188 = vsel %vm270, %v1157, 0
    %1190 = vmatprep.subr.mxu0 %v1151
    %1191 = vmatpush1.msra.mxu0 %v1150
    %1192 = vmatprep.subr.mxu0 %v1182
    %1193 = vmatpush1.msra.mxu0 %v1179
    %1194 = vmatprep.subr.mxu0 0.0
    %1195 = vmatpush1.msra.mxu0 0.0
    %1196 = vmatprep.subr.mxu0 0.0
    %1197 = vmatpush1.msra.mxu0 0.0
    %1198 = vmatprep.subr.mxu0 0.0
    %1199 = vmatpush1.msra.mxu0 0.0
    %1200 = vmatprep.subr.mxu0 0.0
    %1201 = vmatpush1.msra.mxu0 0.0
    %1202 = vmatprep.subr.mxu0 0.0
    %1203 = vmatpush1.msra.mxu0 0.0
    %1204 = vmatprep.subr.mxu0 0.0
    %1205 = vmatpush1.msra.mxu0 0.0
    %1206 = vmatprep.subr.mxu0 0.0
    %1207 = vmatpush1.msra.mxu0 0.0
    %1208 = vmatprep.subr.mxu0 0.0
    %1209 = vmatpush1.msra.mxu0 0.0
    %1210 = vmatprep.subr.mxu0 0.0
    %1211 = vmatpush1.msra.mxu0 0.0
    %1212 = vmatprep.subr.mxu0 0.0
    %1213 = vmatpush1.msra.mxu0 0.0
    %1214 = vmatprep.subr.mxu0 0.0
    %1215 = vmatpush1.msra.mxu0 0.0
    %1216 = vmatprep.subr.mxu0 0.0
    %1217 = vmatpush1.msra.mxu0 0.0
    %1218 = vmatprep.subr.mxu0 0.0
    %1219 = vmatpush1.msra.mxu0 0.0
    %1220 = vmatprep.subr.mxu0 0.0
    %1221 = vmatpush1.msra.mxu0 0.0
    %1222 = vmatprep.subr.mxu0 0.0
    %1223 = vmatpush1.msra.mxu0 0.0
    %1224 = vmatprep.subr.mxu0 0.0
    %1225 = vmatpush1.msra.mxu0 0.0
    %1226 = vmatprep.subr.mxu0 0.0
    %1227 = vmatpush1.msra.mxu0 0.0
    %1228 = vmatprep.subr.mxu0 0.0
    %1229 = vmatpush1.msra.mxu0 0.0
    %1230 = vmatprep.subr.mxu0 0.0
    %1231 = vmatpush1.msra.mxu0 0.0
    %1232 = vmatprep.subr.mxu0 0.0
    %1233 = vmatpush1.msra.mxu0 0.0
    %1234 = vmatprep.subr.mxu0 0.0
    %1235 = vmatpush1.msra.mxu0 0.0
    %1236 = vmatprep.subr.mxu0 0.0
    %1237 = vmatpush1.msra.mxu0 0.0
    %1238 = vmatprep.subr.mxu0 0.0
    %1239 = vmatpush1.msra.mxu0 0.0
    %1240 = vmatprep.subr.mxu0 0.0
    %1241 = vmatpush1.msra.mxu0 0.0
    %1242 = vmatprep.subr.mxu0 0.0
    %1243 = vmatpush1.msra.mxu0 0.0
    %1244 = vmatprep.subr.mxu0 0.0
    %1245 = vmatpush1.msra.mxu0 0.0
    %1246 = vmatprep.subr.mxu0 0.0
    %1247 = vmatpush1.msra.mxu0 0.0
    %1248 = vmatprep.subr.mxu0 0.0
    %1249 = vmatpush1.msra.mxu0 0.0
    %1250 = vmatprep.subr.mxu0 0.0
    %1251 = vmatpush1.msra.mxu0 0.0
    %1252 = vmatprep.subr.mxu0 0.0
    %1253 = vmatpush1.msra.mxu0 0.0
    %1254 = vmatprep.mubr.f32.mxu0 0.0
    %1255 = vmatmul.mubr.f32.gmra.mrb[0].mxu0 %v1176
    %v1256 = vpop.f32.mrb[0].mxu0
    %v1257 = vadd.f32 %v1167, %v1256
    %v1258 = vpop.f32.mrb[0].mxu0
    %v1259 = vadd.f32 %v1168, %v1258
    %1260 = vdwg.mxu0
    %1261 = vmatprep.subr.mxu0 %v1153
    %1262 = vmatpush1.msra.mxu0 %v1152
    %1263 = vmatprep.subr.mxu0 %v1188
    %1264 = vmatpush1.msra.mxu0 %v1185
    %1265 = vmatprep.subr.mxu0 0.0
    %1266 = vmatpush1.msra.mxu0 0.0
    %1267 = vmatprep.subr.mxu0 0.0
    %1268 = vmatpush1.msra.mxu0 0.0
    %1269 = vmatprep.subr.mxu0 0.0
    %1270 = vmatpush1.msra.mxu0 0.0
    %1271 = vmatprep.subr.mxu0 0.0
    %1272 = vmatpush1.msra.mxu0 0.0
    %1273 = vmatprep.subr.mxu0 0.0
    %1274 = vmatpush1.msra.mxu0 0.0
    %1275 = vmatprep.subr.mxu0 0.0
    %1276 = vmatpush1.msra.mxu0 0.0
    %1277 = vmatprep.subr.mxu0 0.0
    %1278 = vmatpush1.msra.mxu0 0.0
    %1279 = vmatprep.subr.mxu0 0.0
    %1280 = vmatpush1.msra.mxu0 0.0
    %1281 = vmatprep.subr.mxu0 0.0
    %1282 = vmatpush1.msra.mxu0 0.0
    %1283 = vmatprep.subr.mxu0 0.0
    %1284 = vmatpush1.msra.mxu0 0.0
    %1285 = vmatprep.subr.mxu0 0.0
    %1286 = vmatpush1.msra.mxu0 0.0
    %1287 = vmatprep.subr.mxu0 0.0
    %1288 = vmatpush1.msra.mxu0 0.0
    %1289 = vmatprep.subr.mxu0 0.0
    %1290 = vmatpush1.msra.mxu0 0.0
    %1291 = vmatprep.subr.mxu0 0.0
    %1292 = vmatpush1.msra.mxu0 0.0
    %1293 = vmatprep.subr.mxu0 0.0
    %1294 = vmatpush1.msra.mxu0 0.0
    %1295 = vmatprep.subr.mxu0 0.0
    %1296 = vmatpush1.msra.mxu0 0.0
    %1297 = vmatprep.subr.mxu0 0.0
    %1298 = vmatpush1.msra.mxu0 0.0
    %1299 = vmatprep.subr.mxu0 0.0
    %1300 = vmatpush1.msra.mxu0 0.0
    %1301 = vmatprep.subr.mxu0 0.0
    %1302 = vmatpush1.msra.mxu0 0.0
    %1303 = vmatprep.subr.mxu0 0.0
    %1304 = vmatpush1.msra.mxu0 0.0
    %1305 = vmatprep.subr.mxu0 0.0
    %1306 = vmatpush1.msra.mxu0 0.0
    %1307 = vmatprep.subr.mxu0 0.0
    %1308 = vmatpush1.msra.mxu0 0.0
    %1309 = vmatprep.subr.mxu0 0.0
    %1310 = vmatpush1.msra.mxu0 0.0
    %1311 = vmatprep.subr.mxu0 0.0
    %1312 = vmatpush1.msra.mxu0 0.0
    %1313 = vmatprep.subr.mxu0 0.0
    %1314 = vmatpush1.msra.mxu0 0.0
    %1315 = vmatprep.subr.mxu0 0.0
    %1316 = vmatpush1.msra.mxu0 0.0
    %1317 = vmatprep.subr.mxu0 0.0
    %1318 = vmatpush1.msra.mxu0 0.0
    %1319 = vmatprep.subr.mxu0 0.0
    %1320 = vmatpush1.msra.mxu0 0.0
    %1321 = vmatprep.subr.mxu0 0.0
    %1322 = vmatpush1.msra.mxu0 0.0
    %1323 = vmatprep.subr.mxu0 0.0
    %1324 = vmatpush1.msra.mxu0 0.0
    %1325 = vmatprep.mubr.f32.mxu0 0.0
    %1326 = vmatmul.mubr.f32.gmra.mrb[0].mxu0 %v1176
    %v1327 = vpop.f32.mrb[0].mxu0
    %v1328 = vadd.f32 %v1169, %v1327
    %v1329 = vpop.f32.mrb[0].mxu0
    %v1330 = vadd.f32 %v1170, %v1329
    %1331 = vdwg.mxu0
    %1332 = vst [vmem:[#allocation7] sm:$0x3f] %v1257
    %1333 = vst [vmem:[#allocation7 + $0x8] sm:$0x3f] %v1259
    %1334 = vst [vmem:[#allocation7 + $0x10] sm:$0x3f] %v1328
    %1335 = vst [vmem:[#allocation7 + $0x18] sm:$0x3f] %v1330
    // Predicated region
    $region26: #{tpu_custom_call.1} parent=1 // pred_check
      _
    $region27: #{tpu_custom_call.1} parent=1 // pred_check_branch
      %1337 = sbr.rel (0) target = $region29
    $region28: #{tpu_custom_call.1} parent=1 // pred_region
      %s1339 = ssub.s32 512, 512
      %1340 = vsyncadd [#allocation4], %s1339
      %s1342 = sshll.u32 [#allocation7], 4
      %s1343 = int_to_ptr.vmem [resolvable:$true] %s1342
      %1345 = dma.vmem_to_hbm [thread:$0]  %s1343, 512, %s4, [#allocation4]
    $region29: #{tpu_custom_call.1} parent=1 // pred_fallthru
      _
    // Predicated region
    $region30: #{tpu_custom_call.1} parent=1 // pred_check
      _
    $region31: #{tpu_custom_call.1} parent=1 // pred_check_branch
      %1347 = sbr.rel (0) target = $region33
    $region32: #{tpu_custom_call.1} parent=1 // pred_region
      %1348 = dma.done [#allocation4], 512
    $region33: #{tpu_custom_call.1} parent=1 // pred_fallthru
      _
    %1349 = vsyncpa [#allocation3], 1
    %1350 = vsyncpa [#allocation6], 1
    %1351 = vsyncpa [#allocation4], 1

</llo_original>
